<compile_context>
chip_gen: v5e
topology: v5e:2x2
jax: 0.10.0
libtpu: 0.0.40
codegen_flags: <defaults>
</compile_context>

<pallas_src>
import functools

import jax
import jax.numpy as jnp
from jax.experimental import pallas as pl
from jax.experimental.pallas import tpu as pltpu


def _round_up(v, m):
    return (v + m - 1) // m * m


def _gabor_kernel(x_ref, w_ref, b_ref, o_ref, *, omega0, sigma0, nh):
    # One fused matmul: [lin_re | lin_im] = [xr|xi] @ [[wr,wi],[-wi,wr]] + [br|bi]
    lin = jnp.dot(x_ref[...], w_ref[...],
                  preferred_element_type=jnp.float32) + b_ref[...]
    lin_re = lin[:, :nh]          # nh is a multiple of 128 -> whole-vreg slices
    lin_im = lin[:, nh:]

    sig2 = sigma0 * sigma0
    # exponent = 1j*omega - |scale|^2
    #          = (-omega0*lin_im - sigma0^2*|lin|^2) + 1j * omega0*lin_re
    exp_re = -omega0 * lin_im - sig2 * (lin_re * lin_re + lin_im * lin_im)
    exp_im = omega0 * lin_re

    mag = jnp.exp(exp_re)
    # Two lane-aligned stores into one lane-dense output slab.
    o_ref[:, :nh] = mag * jnp.cos(exp_im)
    o_ref[:, nh:] = mag * jnp.sin(exp_im)


def complex_gabor_layer(x, w, b, *, omega0=10.0, sigma0=40.0, tile_m=256):
    """x: complex64 (..., in_features); w: complex64 (out, in); b: complex64 (out,)."""
    in_features = x.shape[-1]
    out_features = w.shape[0]
    lead = x.shape[:-1]

    xr = jnp.real(x).reshape(-1, in_features).astype(jnp.float32)
    xi = jnp.imag(x).reshape(-1, in_features).astype(jnp.float32)
    M = xr.shape[0]

    # ---- packed, lane-dense shapes ---------------------------------------
    Nh = _round_up(out_features, 128)      # half-width of packed output
    Np = 2 * Nh                            # packed output width (re | im)
    K2 = 2 * in_features
    Kp = _round_up(K2, 128)                # packed contraction width

    # ---- tile_m from a conservative VMEM budget (safe on v5e/v6e/v7x) ----
    VMEM_BUDGET = 40 << 20                 # headroom under v7x's 64 MiB physical VMEM
    weight_bytes = 4 * (2 * Kp * Np + 2 * Np)      # double-buffered W + bias
    per_row_bytes = 4 * 2 * (Kp + Np)              # double-buffered x tile + out tile
    tm_cap = max(8, ((VMEM_BUDGET - weight_bytes) // per_row_bytes) // 8 * 8)
    tm = max(8, min(_round_up(tile_m, 8), _round_up(M, 8), tm_cap))
    Mp = _round_up(M, tm)
    grid_m = Mp // tm

    # ---- pack & pad operands (zero padding is exact: contributes 0) ------
    xp = jnp.concatenate([xr, xi], axis=-1)                       # (M, 2K)
    xp = jnp.pad(xp, ((0, Mp - M), (0, Kp - K2)))                 # (Mp, Kp)

    wr = jnp.real(w).T.astype(jnp.float32)                        # (K, N)
    wi = jnp.imag(w).T.astype(jnp.float32)
    wrp = jnp.pad(wr, ((0, 0), (0, Nh - out_features)))
    wip = jnp.pad(wi, ((0, 0), (0, Nh - out_features)))
    wp = jnp.concatenate(
        [jnp.concatenate([wrp, wip], axis=-1),
         jnp.concatenate([-wip, wrp], axis=-1)], axis=0)          # (2K, Np)
    wp = jnp.pad(wp, ((0, Kp - K2), (0, 0)))                      # (Kp, Np)

    br = jnp.pad(jnp.real(b).astype(jnp.float32), (0, Nh - out_features))
    bi = jnp.pad(jnp.imag(b).astype(jnp.float32), (0, Nh - out_features))
    bp = jnp.concatenate([br, bi]).reshape(1, Np)                 # (1, Np)

    kernel = functools.partial(_gabor_kernel,
                               omega0=float(omega0),
                               sigma0=float(sigma0),
                               nh=Nh)

    x_spec = pl.BlockSpec((tm, Kp), lambda i: (i, 0))
    w_spec = pl.BlockSpec((Kp, Np), lambda i: (0, 0))   # resident across grid
    b_spec = pl.BlockSpec((1, Np), lambda i: (0, 0))
    o_spec = pl.BlockSpec((tm, Np), lambda i: (i, 0))

    vmem_limit = int(min(max(weight_bytes + tm * per_row_bytes + (2 << 20),
                             16 << 20), 48 << 20))

    out_packed = pl.pallas_call(
        kernel,
        grid_spec=pltpu.PrefetchScalarGridSpec(
            num_scalar_prefetch=0,
            grid=(grid_m,),
            in_specs=[x_spec, w_spec, b_spec],
            out_specs=o_spec,
        ),
        out_shape=jax.ShapeDtypeStruct((Mp, Np), jnp.float32),
        compiler_params=pltpu.CompilerParams(
            dimension_semantics=("parallel",),
            vmem_limit_bytes=vmem_limit),
    )(xp, wp, bp)

    out_re = out_packed[:M, :out_features]
    out_im = out_packed[:M, Nh:Nh + out_features]
    out = (out_re + 1j * out_im).astype(jnp.complex64)
    return out.reshape(lead + (out_features,))


def _reference(x, w, b, omega0, sigma0):
    lin = jnp.einsum("...k,nk->...n", x, w) + b
    omega = omega0 * lin
    scale = sigma0 * lin
    return jnp.exp(1j * omega - jnp.square(jnp.abs(scale)))


if __name__ == "__main__":
    key = jax.random.PRNGKey(0)
    k_xr, k_xi, k_wr, k_wi, k_br, k_bi = jax.random.split(key, 6)

    # small shapes: batch=2, seq=8, in_features=32, out_features=32
    B, S, IN, OUT = 2, 8, 32, 32
    omega0, sigma0 = 10.0, 40.0

    # input (complex, since is_first=False -> cfloat linear)
    x = (jax.random.normal(k_xr, (B, S, IN), jnp.float32)
         + 1j * jax.random.normal(k_xi, (B, S, IN), jnp.float32)).astype(jnp.complex64)

    # deterministic parameter init, ~ nn.Linear uniform(-1/sqrt(in), 1/sqrt(in))
    bound = 1.0 / (IN ** 0.5)
    w = (jax.random.uniform(k_wr, (OUT, IN), jnp.float32, -bound, bound)
         + 1j * jax.random.uniform(k_wi, (OUT, IN), jnp.float32, -bound, bound)
         ).astype(jnp.complex64)
    b = (jax.random.uniform(k_br, (OUT,), jnp.float32, -bound, bound)
         + 1j * jax.random.uniform(k_bi, (OUT,), jnp.float32, -bound, bound)
         ).astype(jnp.complex64)

    out = complex_gabor_layer(x, w, b, omega0=omega0, sigma0=sigma0)
    out = jax.block_until_ready(out)

    ref = _reference(x, w, b, omega0, sigma0)
    assert out.shape == (B, S, OUT) and out.dtype == jnp.complex64
    assert jnp.allclose(out, ref, atol=1e-4, rtol=1e-4)

    print("KERNEL_OK")
</pallas_src>

<mosaic_0001>
module attributes {stable_mosaic.version = 11 : i64} {
  func.func @_gabor_kernel(%arg0: i32, %arg1: memref<16x128xf32, #tpu.memory_space<vmem>>, %arg2: memref<128x256xf32, #tpu.memory_space<vmem>>, %arg3: memref<1x256xf32, #tpu.memory_space<vmem>>, %arg4: memref<16x256xf32, #tpu.memory_space<vmem>>) attributes {dimension_semantics = [#tpu.dimension_semantics<parallel>], iteration_bounds = array<i64: 1>, scalar_prefetch = 0 : i64, scratch_operands = 0 : i64, tpu.core_type = #tpu.core_type<tc>, window_params = [{transform_indices = @transform_0, window_bounds = array<i64: 16, 128>}, {pipeline_mode = #tpu.pipeline_mode<synchronous>, transform_indices = @transform_1, window_bounds = array<i64: 128, 256>}, {pipeline_mode = #tpu.pipeline_mode<synchronous>, transform_indices = @transform_2, window_bounds = array<i64: 1, 256>}, {transform_indices = @transform_3, window_bounds = array<i64: 16, 256>}]} {
    %c0 = arith.constant 0 : index
    %c0_0 = arith.constant 0 : index
    %0 = vector.load %arg1[%c0, %c0_0] : memref<16x128xf32, #tpu.memory_space<vmem>>, vector<16x128xf32>
    %c0_1 = arith.constant 0 : index
    %c0_2 = arith.constant 0 : index
    %1 = vector.load %arg2[%c0_1, %c0_2] : memref<128x256xf32, #tpu.memory_space<vmem>>, vector<128x256xf32>
    %cst = arith.constant dense<0.000000e+00> : vector<16x256xf32>
    %2 = tpu.matmul %0, %1, %cst {dimension_numbers = #tpu.dot_dimension_numbers<[1], [0], [0], [1], [0, 0, 1, 1], [], []>} : vector<16x128xf32>, vector<128x256xf32>, vector<16x256xf32> -> vector<16x256xf32>
    %c0_3 = arith.constant 0 : index
    %c0_4 = arith.constant 0 : index
    %3 = vector.load %arg3[%c0_3, %c0_4] : memref<1x256xf32, #tpu.memory_space<vmem>>, vector<1x256xf32>
    %4 = vector.broadcast %3 : vector<1x256xf32> to vector<16x256xf32>
    %5 = arith.addf %2, %4 : vector<16x256xf32>
    %6 = vector.extract_strided_slice %5 {offsets = [0, 0], sizes = [16, 128], strides = [1, 1]} : vector<16x256xf32> to vector<16x128xf32>
    %7 = vector.extract_strided_slice %5 {offsets = [0, 128], sizes = [16, 128], strides = [1, 1]} : vector<16x256xf32> to vector<16x128xf32>
    %cst_5 = arith.constant -1.000000e+01 : f32
    %8 = vector.broadcast %cst_5 : f32 to vector<16x128xf32>
    %9 = arith.mulf %8, %7 : vector<16x128xf32>
    %10 = arith.mulf %6, %6 : vector<16x128xf32>
    %11 = arith.mulf %7, %7 : vector<16x128xf32>
    %12 = arith.addf %10, %11 : vector<16x128xf32>
    %cst_6 = arith.constant 1.600000e+03 : f32
    %13 = vector.broadcast %cst_6 : f32 to vector<16x128xf32>
    %14 = arith.mulf %13, %12 : vector<16x128xf32>
    %15 = arith.subf %9, %14 : vector<16x128xf32>
    %cst_7 = arith.constant 1.000000e+01 : f32
    %16 = vector.broadcast %cst_7 : f32 to vector<16x128xf32>
    %17 = arith.mulf %16, %6 : vector<16x128xf32>
    %18 = math.exp %15 : vector<16x128xf32>
    %19 = math.cos %17 : vector<16x128xf32>
    %20 = arith.mulf %18, %19 : vector<16x128xf32>
    %c0_8 = arith.constant 0 : index
    %c0_9 = arith.constant 0 : index
    %21 = vector.load %arg4[%c0_8, %c0_9] : memref<16x256xf32, #tpu.memory_space<vmem>>, vector<16x128xf32>
    tpu.vector_store %arg4[%c0_8, %c0_9], %20 {strides = array<i32>} : memref<16x256xf32, #tpu.memory_space<vmem>>, vector<16x128xf32>,
    %22 = math.sin %17 : vector<16x128xf32>
    %23 = arith.mulf %18, %22 : vector<16x128xf32>
    %c0_10 = arith.constant 0 : index
    %c128 = arith.constant 128 : index
    %24 = vector.load %arg4[%c0_10, %c128] : memref<16x256xf32, #tpu.memory_space<vmem>>, vector<16x128xf32>
    tpu.vector_store %arg4[%c0_10, %c128], %23 {strides = array<i32>} : memref<16x256xf32, #tpu.memory_space<vmem>>, vector<16x128xf32>,
    return
  }
  func.func @transform_0(%arg0: i32) -> (i32, i32) {
    %c0_i32 = arith.constant 0 : i32
    %c0_i32_0 = arith.constant 0 : i32
    return %arg0, %c0_i32 : i32, i32
  }
  func.func @transform_1(%arg0: i32) -> (i32, i32) {
    %c0_i32 = arith.constant 0 : i32
    %c0_i32_0 = arith.constant 0 : i32
    %c0_i32_1 = arith.constant 0 : i32
    return %c0_i32, %c0_i32_0 : i32, i32
  }
  func.func @transform_2(%arg0: i32) -> (i32, i32) {
    %c0_i32 = arith.constant 0 : i32
    %c0_i32_0 = arith.constant 0 : i32
    %c0_i32_1 = arith.constant 0 : i32
    return %c0_i32, %c0_i32_0 : i32, i32
  }
  func.func @transform_3(%arg0: i32) -> (i32, i32) {
    %c0_i32 = arith.constant 0 : i32
    %c0_i32_0 = arith.constant 0 : i32
    return %arg0, %c0_i32 : i32, i32
  }
}

</mosaic_0001>

<llo_original>
// kernel: tpu_custom_call.1
$region0: #{tpu_custom_call.1}
  #allocation0 [shape = 'u32[]', space=smem, size = 0x4, offset = 0x4, fixed_abs, tag = 'smem constant byte address 0x4 - core index']
  #allocation1 [shape = 'u32[72,128]{1,0:T(1,128)}', space=vmem, size = 0x9000, scoped, tag = 'internal scratch']
  %s0 = inlined_call_operand.hbm [shape: f32[16,128], index: 0, kind: input, shape index: {}]
  %s1 = inlined_call_operand.hbm [shape: f32[128,256], index: 1, kind: input, shape index: {}]
  %s2 = inlined_call_operand.hbm [shape: f32[1,256], index: 2, kind: input, shape index: {}]
  %s3 = inlined_call_operand.hbm [shape: f32[16,256], index: 3, kind: output, shape index: {}]
  %s4 = sld [smem:[#allocation0]]
  $region34: #{tpu_custom_call.1} parent=0
    _
  %s6 = ssub.s32 1, %s4
  %s7 = scalar_select 0, %s6, %s4
  $region1: #{tpu_custom_call.1} parent=0
    #allocation2 [shape = 'u8[8192]{0}', space=vmem, size = 0x2000, scoped, tag = 'input window, operand 0, single buffered']
    #allocation3 [shape = 's32[1]{0}', space=sflag, size = 0x4, scoped, tag = 'scoped memory for tpu_custom_call.1']
    #allocation4 [shape = 's32[1]{0}', space=sflag, size = 0x4, scoped, tag = 'scoped memory for tpu_custom_call.1']
    #allocation5 [shape = 'u8[131072]{0}', space=vmem, size = 0x20000, scoped, tag = 'input window, operand 1, single buffered']
    #allocation6 [shape = 's32[1]{0}', space=sflag, size = 0x4, scoped, tag = 'scoped memory for tpu_custom_call.1']
    #allocation7 [shape = 'u8[1024]{0}', space=vmem, size = 0x400, scoped, tag = 'input window, operand 2, single buffered']
    #allocation8 [shape = 'u8[16384]{0}', space=vmem, size = 0x4000, scoped, tag = 'output window, operand 0, single buffered']
    %8 = vsyncpa [#allocation3], 0
    %9 = vsyncpa [#allocation6], 0
    %10 = vsyncpa [#allocation4], 0
    // Predicated region
    $region2: #{tpu_custom_call.1} parent=1 // pred_check
      _
    $region3: #{tpu_custom_call.1} parent=1 // pred_check_branch
      %12 = sbr.rel (0) target = $region5
    $region4: #{tpu_custom_call.1} parent=1 // pred_region
      %14 = vsyncadd [#allocation3], 0
      %s15 = sshll.u32 %s0, 4
      %s16 = int_to_ptr.hbm [resolvable:$true] %s15
      %s17 = sshll.u32 [#allocation2], 4
      %s18 = int_to_ptr.vmem [resolvable:$true] %s17
      %23 = dma.hbm_to_vmem [thread:$0]  %s16, 256, %s18, [#allocation3], 128, 128, 8
    $region5: #{tpu_custom_call.1} parent=1 // pred_fallthru
      _
    // Predicated region
    $region6: #{tpu_custom_call.1} parent=1 // pred_check
      _
    $region7: #{tpu_custom_call.1} parent=1 // pred_check_branch
      %25 = sbr.rel (0) target = $region9
    $region8: #{tpu_custom_call.1} parent=1 // pred_region
      %27 = vsyncadd [#allocation6], 0
      %s28 = sshll.u32 %s1, 4
      %s29 = int_to_ptr.hbm [resolvable:$true] %s28
      %s30 = sshll.u32 [#allocation5], 4
      %s31 = int_to_ptr.vmem [resolvable:$true] %s30
      %36 = dma.hbm_to_vmem [thread:$0]  %s29, 4096, %s31, [#allocation6], 256, 256, 16
    $region9: #{tpu_custom_call.1} parent=1 // pred_fallthru
      _
    // Predicated region
    $region10: #{tpu_custom_call.1} parent=1 // pred_check
      _
    $region11: #{tpu_custom_call.1} parent=1 // pred_check_branch
      %38 = sbr.rel (0) target = $region13
    $region12: #{tpu_custom_call.1} parent=1 // pred_region
      %40 = vsyncadd [#allocation6], 0
      %s42 = sshll.u32 %s2, 4
      %s43 = int_to_ptr.hbm [resolvable:$true] %s42
      %s44 = sshll.u32 [#allocation7], 4
      %s45 = int_to_ptr.vmem [resolvable:$true] %s44
      %47 = dma.hbm_to_vmem [thread:$0]  %s43, 32, %s45, [#allocation6]
    $region13: #{tpu_custom_call.1} parent=1 // pred_fallthru
      _
    // Predicated region
    $region14: #{tpu_custom_call.1} parent=1 // pred_check
      _
    $region15: #{tpu_custom_call.1} parent=1 // pred_check_branch
      %49 = sbr.rel (0) target = $region17
    $region16: #{tpu_custom_call.1} parent=1 // pred_region
      %51 = dma.done [#allocation3], 256
    $region17: #{tpu_custom_call.1} parent=1 // pred_fallthru
      _
    // Predicated region
    $region18: #{tpu_custom_call.1} parent=1 // pred_check
      _
    $region19: #{tpu_custom_call.1} parent=1 // pred_check_branch
      %53 = sbr.rel (0) target = $region21
    $region20: #{tpu_custom_call.1} parent=1 // pred_region
      %55 = dma.done [#allocation6], 4096
    $region21: #{tpu_custom_call.1} parent=1 // pred_fallthru
      _
    // Predicated region
    $region22: #{tpu_custom_call.1} parent=1 // pred_check
      _
    $region23: #{tpu_custom_call.1} parent=1 // pred_check_branch
      %57 = sbr.rel (0) target = $region25
    $region24: #{tpu_custom_call.1} parent=1 // pred_region
      %59 = dma.done [#allocation6], 32
    $region25: #{tpu_custom_call.1} parent=1 // pred_fallthru
      _
    %v60 = vld [vmem:[#allocation2] sm:$0xff]
    %v61 = vld [vmem:[#allocation2 + $0x8] sm:$0xff]
    %v62 = vld [vmem:[#allocation5] sm:$0xff]
    %v63 = vld [vmem:[#allocation5 + $0x8] sm:$0xff]
    %v64 = vld [vmem:[#allocation5 + $0x10] sm:$0xff]
    %v65 = vld [vmem:[#allocation5 + $0x18] sm:$0xff]
    %v66 = vld [vmem:[#allocation5 + $0x20] sm:$0xff]
    %v67 = vld [vmem:[#allocation5 + $0x28] sm:$0xff]
    %v68 = vld [vmem:[#allocation5 + $0x30] sm:$0xff]
    %v69 = vld [vmem:[#allocation5 + $0x38] sm:$0xff]
    %v70 = vld [vmem:[#allocation5 + $0x40] sm:$0xff]
    %v71 = vld [vmem:[#allocation5 + $0x48] sm:$0xff]
    %v72 = vld [vmem:[#allocation5 + $0x50] sm:$0xff]
    %v73 = vld [vmem:[#allocation5 + $0x58] sm:$0xff]
    %v74 = vld [vmem:[#allocation5 + $0x60] sm:$0xff]
    %v75 = vld [vmem:[#allocation5 + $0x68] sm:$0xff]
    %v76 = vld [vmem:[#allocation5 + $0x70] sm:$0xff]
    %v77 = vld [vmem:[#allocation5 + $0x78] sm:$0xff]
    %v78 = vld [vmem:[#allocation5 + $0x80] sm:$0xff]
    %v79 = vld [vmem:[#allocation5 + $0x88] sm:$0xff]
    %v80 = vld [vmem:[#allocation5 + $0x90] sm:$0xff]
    %v81 = vld [vmem:[#allocation5 + $0x98] sm:$0xff]
    %v82 = vld [vmem:[#allocation5 + $0xa0] sm:$0xff]
    %v83 = vld [vmem:[#allocation5 + $0xa8] sm:$0xff]
    %v84 = vld [vmem:[#allocation5 + $0xb0] sm:$0xff]
    %v85 = vld [vmem:[#allocation5 + $0xb8] sm:$0xff]
    %v86 = vld [vmem:[#allocation5 + $0xc0] sm:$0xff]
    %v87 = vld [vmem:[#allocation5 + $0xc8] sm:$0xff]
    %v88 = vld [vmem:[#allocation5 + $0xd0] sm:$0xff]
    %v89 = vld [vmem:[#allocation5 + $0xd8] sm:$0xff]
    %v90 = vld [vmem:[#allocation5 + $0xe0] sm:$0xff]
    %v91 = vld [vmem:[#allocation5 + $0xe8] sm:$0xff]
    %v92 = vld [vmem:[#allocation5 + $0xf0] sm:$0xff]
    %v93 = vld [vmem:[#allocation5 + $0xf8] sm:$0xff]
    %v94 = vld [vmem:[#allocation7] sm:$0x3]
    %v96 = vperm.slane %v94, 0
    %v97 = vperm.slane %v94, 1
    %100 = vmatpush.msra.mxu0 %v92
    %101 = vmatpush.msra.mxu0 %v90
    %102 = vmatpush.msra.mxu0 %v88
    %103 = vmatpush.msra.mxu0 %v86
    %104 = vmatpush.msra.mxu0 %v84
    %105 = vmatpush.msra.mxu0 %v82
    %106 = vmatpush.msra.mxu0 %v80
    %107 = vmatpush.msra.mxu0 %v78
    %108 = vmatpush.msra.mxu0 %v76
    %109 = vmatpush.msra.mxu0 %v74
    %110 = vmatpush.msra.mxu0 %v72
    %111 = vmatpush.msra.mxu0 %v70
    %112 = vmatpush.msra.mxu0 %v68
    %113 = vmatpush.msra.mxu0 %v66
    %114 = vmatpush.msra.mxu0 %v64
    %115 = vmatpush.msra.mxu0 %v62
    %116 = vmatmul.f32.gmra.mxu0 %v60
    %v117 = vpop.f32.mrf.mxu0
    %v118 = vadd.f32 %v96, %v117
    %119 = vmatmul.f32.gmra.mxu0 %v61
    %v120 = vpop.f32.mrf.mxu0
    %v121 = vadd.f32 %v96, %v120
    %122 = vdwg.mxu0
    %123 = vmatpush.msra.mxu0 %v93
    %124 = vmatpush.msra.mxu0 %v91
    %125 = vmatpush.msra.mxu0 %v89
    %126 = vmatpush.msra.mxu0 %v87
    %127 = vmatpush.msra.mxu0 %v85
    %128 = vmatpush.msra.mxu0 %v83
    %129 = vmatpush.msra.mxu0 %v81
    %130 = vmatpush.msra.mxu0 %v79
    %131 = vmatpush.msra.mxu0 %v77
    %132 = vmatpush.msra.mxu0 %v75
    %133 = vmatpush.msra.mxu0 %v73
    %134 = vmatpush.msra.mxu0 %v71
    %135 = vmatpush.msra.mxu0 %v69
    %136 = vmatpush.msra.mxu0 %v67
    %137 = vmatpush.msra.mxu0 %v65
    %138 = vmatpush.msra.mxu0 %v63
    %139 = vmatmul.f32.gmra.mxu0 %v60
    %v140 = vpop.f32.mrf.mxu0
    %v141 = vadd.f32 %v97, %v140
    %142 = vmatmul.f32.gmra.mxu0 %v61
    %v143 = vpop.f32.mrf.mxu0
    %v144 = vadd.f32 %v97, %v143
    %145 = vdwg.mxu0
    %v146 = vmul.f32 %v141, -10.0
    %v147 = vmul.f32 %v144, -10.0
    %v148 = vmul.f32 %v118, %v118
    %v149 = vmul.f32 %v121, %v121
    %v150 = vmul.f32 %v141, %v141
    %v151 = vmul.f32 %v144, %v144
    %v152 = vadd.f32 %v148, %v150
    %v153 = vadd.f32 %v149, %v151
    %v154 = vmul.f32 %v152, 1600.0
    %v155 = vmul.f32 %v153, 1600.0
    %v156 = vsub.f32 %v146, %v154
    %v157 = vsub.f32 %v147, %v155
    %v158 = vmul.f32 %v118, 10.0
    %v159 = vmul.f32 %v121, 10.0
    %v160 = vmul.f32 %v156, 1.442695
    %v161 = vpow.pop %v160
    %v162 = vmul.f32 %v157, 1.442695
    %v163 = vpow.pop %v162
    %v164 = vand.u32 2147483647, %v158
    %vm165 = vcmp.le.f32.partialorder %v164, 0.7853982
    %vm166 = vcmp.lt.s32.totalorder %v158, 0
    %v167 = vand.u32 %v158, 2139095040
    %v168 = vshrl.u32 %v167, 23
    %v169 = vsub.s32 %v168, 127
    %v170 = vand.u32 2147483647, %v158
    %v171 = vand.u32 %v170, 8388607
    %v172 = vor.u32 %v171, 8388608
    %v173 = vsub.s32 0, %v172
    %v174 = vadd.s32 %v169, 1
    %vm175 = vcmp.gt.s32.totalorder %v174, 0
    %v176 = vsel %vm175, %v174, 0
    %v177 = vshrl.u32 %v176, 5
    %v178 = vand.u32 %v176, 31
    %v179 = vsub.s32 32, %v178
    %v180 = vshrl.u32 683565275, %v179
    %v181 = vshll.u32 683565275, %v178
    %v182 = vshrl.u32 2475754826, %v179
    %v183 = vor.u32 %v181, %v182
    %v184 = vshll.u32 2475754826, %v178
    %v185 = vshrl.u32 2131351028, %v179
    %v186 = vor.u32 %v184, %v185
    %v187 = vshll.u32 2131351028, %v178
    %v188 = vshrl.u32 2102212464, %v179
    %v189 = vor.u32 %v187, %v188
    %v190 = vshll.u32 2102212464, %v178
    %v191 = vshrl.u32 920167782, %v179
    %v192 = vor.u32 %v190, %v191
    %v193 = vshll.u32 920167782, %v178
    %v194 = vshrl.u32 1326507024, %v179
    %v195 = vor.u32 %v193, %v194
    %vm196 = vcmp.lt.s32.totalorder %v177, 1
    %vm197 = vcmp.lt.s32.totalorder %v177, 2
    %vm198 = vcmp.lt.s32.totalorder %v177, 3
    %vm199 = vcmp.lt.s32.totalorder %v177, 4
    %v200 = vsel %vm196, %v180, %v183
    %v201 = vsel %vm199, %v189, 2102212464
    %v202 = vsel %vm198, %v186, %v201
    %v203 = vsel %vm197, %v200, %v202
    %v204 = vsel %vm196, %v183, %v186
    %v205 = vsel %vm199, %v192, 920167782
    %v206 = vsel %vm198, %v189, %v205
    %v207 = vsel %vm197, %v204, %v206
    %v208 = vsel %vm196, %v186, %v189
    %v209 = vsel %vm199, %v195, 1326507024
    %v210 = vsel %vm198, %v192, %v209
    %v211 = vsel %vm197, %v208, %v210
    %v212 = vshll.u32 %v172, 8
    %v213 = vand.u32 %v212, 65535
    %v214 = vshrl.u32 %v212, 16
    %v215 = vand.u32 %v211, 65535
    %v216 = vshrl.u32 %v211, 16
    %v217 = vmul.u32 %v213, %v215
    %v218 = vmul.u32 %v213, %v216
    %v219 = vmul.u32 %v214, %v215
    %v220 = vmul.u32 %v214, %v216
    %v221 = vshll.u32 %v218, 16
    %v222 = vshrl.u32 %v218, 16
    %v223 = vshll.u32 %v219, 16
    %v224 = vshrl.u32 %v219, 16
    %vm225 = vc.u32 %v217, %v221
    %v226 = vsel %vm225, 1, 0
    %v227 = vadd.s32 %v217, %v221
    %v228 = vadd.s32 %v220, %v226
    %vm229 = vc.u32 %v227, %v223
    %v230 = vsel %vm229, 1, 0
    %v231 = vadd.s32 %v227, %v223
    %v232 = vadd.s32 %v228, %v230
    %v233 = vadd.s32 %v232, %v222
    %v234 = vadd.s32 %v233, %v224
    %v235 = vand.u32 %v212, 65535
    %v236 = vshrl.u32 %v212, 16
    %v237 = vand.u32 %v207, 65535
    %v238 = vshrl.u32 %v207, 16
    %v239 = vmul.u32 %v235, %v237
    %v240 = vmul.u32 %v235, %v238
    %v241 = vmul.u32 %v236, %v237
    %v242 = vmul.u32 %v236, %v238
    %v243 = vshll.u32 %v240, 16
    %v244 = vshrl.u32 %v240, 16
    %v245 = vshll.u32 %v241, 16
    %v246 = vshrl.u32 %v241, 16
    %vm247 = vc.u32 %v239, %v243
    %v248 = vsel %vm247, 1, 0
    %v249 = vadd.s32 %v239, %v243
    %v250 = vadd.s32 %v242, %v248
    %vm251 = vc.u32 %v249, %v245
    %v252 = vsel %vm251, 1, 0
    %v253 = vadd.s32 %v249, %v245
    %v254 = vadd.s32 %v250, %v252
    %v255 = vadd.s32 %v254, %v244
    %v256 = vadd.s32 %v255, %v246
    %v257 = vmul.u32 %v212, %v203
    %v258 = vadd.s32 %v234, %v253
    %vm259 = vc.u32 %v234, %v253
    %v260 = vadd.s32 %v256, 1
    %v261 = vsel %vm259, %v260, %v256
    %v262 = vadd.s32 %v257, %v261
    %v263 = vadd.s32 %v262, 536870912
    %v264 = vshrl.u32 %v263, 30
    %v265 = vshll.u32 %v264, 30
    %v266 = vsub.s32 %v262, %v265
    %vm267 = vcmp.lt.s32.totalorder %v266, 0
    %v268 = vsub.s32 0, %v266
    %v269 = vsel %vm267, %v268, %v266
    %v270 = vclz %v269
    %v271 = vsub.s32 %v270, 2
    %vm272 = vcmp.gt.s32.totalorder 0, %v271
    %v273 = vsel %vm272, 0, %v271
    %v274 = vsub.s32 32, %v273
    %v275 = vshll.u32 %v266, %v273
    %v276 = vshrl.u32 %v258, %v274
    %v277 = vor.u32 %v275, %v276
    %v278 = vsub.s32 4294967266, %v273
    %v279 = vadd.s32 %v278, 127
    %v280 = vshll.u32 %v279, 23
    %v281 = vor.u32 4788187, %v280
    %v282 = vand.u32 2147483647, %v281
    %v284 = vcvt.s32.f32 %v277
    %v285 = vmul.f32 %v284, %v282
    %v286 = vxor.u32 %v285, 2147483648
    %v287 = vsel %vm166, %v286, %v285
    %v288 = vsub.s32 4, %v264
    %v289 = vsel %vm166, %v288, %v264
    %v290 = vsel %vm165, %v158, %v287
    %v291 = vsel %vm165, 0, %v289
    %v292 = vmul.f32 %v290, %v290
    %v293 = vmul.f32 %v292, -0.001358992
    %v294 = vadd.f32 %v293, 0.041655596
    %v295 = vmul.f32 %v292, %v294
    %v296 = vadd.f32 %v295, -0.4999988
    %v297 = vmul.f32 %v292, %v296
    %v298 = vadd.f32 1.0, %v297
    %v299 = vmul.f32 %v290, %v290
    %v300 = vmul.f32 %v299, -0.00019511016
    %v301 = vadd.f32 %v300, 0.008332121
    %v302 = vmul.f32 %v299, %v301
    %v303 = vadd.f32 %v302, -0.16666654
    %v304 = vmul.f32 %v299, %v303
    %v305 = vadd.f32 %v304, 1.0
    %v306 = vmul.f32 %v305, %v290
    %vm307 = vweird.f32 %v158
    %v308 = vand.u32 %v291, 3
    %vm309 = vcmp.lt.s32.totalorder %v308, 2
    %vm310 = vcmp.eq.s32.totalorder %v308, 0
    %v311 = vxor.u32 %v306, 2147483648
    %v312 = vsel %vm310, %v298, %v311
    %vm313 = vcmp.eq.s32.totalorder %v308, 2
    %v314 = vxor.u32 %v298, 2147483648
    %v315 = vsel %vm313, %v314, %v306
    %v316 = vsel %vm309, %v312, %v315
    %v317 = vsel %vm307, nan, %v316
    %v318 = vand.u32 2147483647, %v159
    %vm319 = vcmp.le.f32.partialorder %v318, 0.7853982
    %vm320 = vcmp.lt.s32.totalorder %v159, 0
    %v321 = vand.u32 %v159, 2139095040
    %v322 = vshrl.u32 %v321, 23
    %v323 = vsub.s32 %v322, 127
    %v324 = vand.u32 2147483647, %v159
    %v325 = vand.u32 %v324, 8388607
    %v326 = vor.u32 %v325, 8388608
    %v327 = vsub.s32 0, %v326
    %v328 = vadd.s32 %v323, 1
    %vm329 = vcmp.gt.s32.totalorder %v328, 0
    %v330 = vsel %vm329, %v328, 0
    %v331 = vshrl.u32 %v330, 5
    %v332 = vand.u32 %v330, 31
    %v333 = vsub.s32 32, %v332
    %v334 = vshrl.u32 683565275, %v333
    %v335 = vshll.u32 683565275, %v332
    %v336 = vshrl.u32 2475754826, %v333
    %v337 = vor.u32 %v335, %v336
    %v338 = vshll.u32 2475754826, %v332
    %v339 = vshrl.u32 2131351028, %v333
    %v340 = vor.u32 %v338, %v339
    %v341 = vshll.u32 2131351028, %v332
    %v342 = vshrl.u32 2102212464, %v333
    %v343 = vor.u32 %v341, %v342
    %v344 = vshll.u32 2102212464, %v332
    %v345 = vshrl.u32 920167782, %v333
    %v346 = vor.u32 %v344, %v345
    %v347 = vshll.u32 920167782, %v332
    %v348 = vshrl.u32 1326507024, %v333
    %v349 = vor.u32 %v347, %v348
    %vm350 = vcmp.lt.s32.totalorder %v331, 1
    %vm351 = vcmp.lt.s32.totalorder %v331, 2
    %vm352 = vcmp.lt.s32.totalorder %v331, 3
    %vm353 = vcmp.lt.s32.totalorder %v331, 4
    %v354 = vsel %vm350, %v334, %v337
    %v355 = vsel %vm353, %v343, 2102212464
    %v356 = vsel %vm352, %v340, %v355
    %v357 = vsel %vm351, %v354, %v356
    %v358 = vsel %vm350, %v337, %v340
    %v359 = vsel %vm353, %v346, 920167782
    %v360 = vsel %vm352, %v343, %v359
    %v361 = vsel %vm351, %v358, %v360
    %v362 = vsel %vm350, %v340, %v343
    %v363 = vsel %vm353, %v349, 1326507024
    %v364 = vsel %vm352, %v346, %v363
    %v365 = vsel %vm351, %v362, %v364
    %v366 = vshll.u32 %v326, 8
    %v367 = vand.u32 %v366, 65535
    %v368 = vshrl.u32 %v366, 16
    %v369 = vand.u32 %v365, 65535
    %v370 = vshrl.u32 %v365, 16
    %v371 = vmul.u32 %v367, %v369
    %v372 = vmul.u32 %v367, %v370
    %v373 = vmul.u32 %v368, %v369
    %v374 = vmul.u32 %v368, %v370
    %v375 = vshll.u32 %v372, 16
    %v376 = vshrl.u32 %v372, 16
    %v377 = vshll.u32 %v373, 16
    %v378 = vshrl.u32 %v373, 16
    %vm379 = vc.u32 %v371, %v375
    %v380 = vsel %vm379, 1, 0
    %v381 = vadd.s32 %v371, %v375
    %v382 = vadd.s32 %v374, %v380
    %vm383 = vc.u32 %v381, %v377
    %v384 = vsel %vm383, 1, 0
    %v385 = vadd.s32 %v381, %v377
    %v386 = vadd.s32 %v382, %v384
    %v387 = vadd.s32 %v386, %v376
    %v388 = vadd.s32 %v387, %v378
    %v389 = vand.u32 %v366, 65535
    %v390 = vshrl.u32 %v366, 16
    %v391 = vand.u32 %v361, 65535
    %v392 = vshrl.u32 %v361, 16
    %v393 = vmul.u32 %v389, %v391
    %v394 = vmul.u32 %v389, %v392
    %v395 = vmul.u32 %v390, %v391
    %v396 = vmul.u32 %v390, %v392
    %v397 = vshll.u32 %v394, 16
    %v398 = vshrl.u32 %v394, 16
    %v399 = vshll.u32 %v395, 16
    %v400 = vshrl.u32 %v395, 16
    %vm401 = vc.u32 %v393, %v397
    %v402 = vsel %vm401, 1, 0
    %v403 = vadd.s32 %v393, %v397
    %v404 = vadd.s32 %v396, %v402
    %vm405 = vc.u32 %v403, %v399
    %v406 = vsel %vm405, 1, 0
    %v407 = vadd.s32 %v403, %v399
    %v408 = vadd.s32 %v404, %v406
    %v409 = vadd.s32 %v408, %v398
    %v410 = vadd.s32 %v409, %v400
    %v411 = vmul.u32 %v366, %v357
    %v412 = vadd.s32 %v388, %v407
    %vm413 = vc.u32 %v388, %v407
    %v414 = vadd.s32 %v410, 1
    %v415 = vsel %vm413, %v414, %v410
    %v416 = vadd.s32 %v411, %v415
    %v417 = vadd.s32 %v416, 536870912
    %v418 = vshrl.u32 %v417, 30
    %v419 = vshll.u32 %v418, 30
    %v420 = vsub.s32 %v416, %v419
    %vm421 = vcmp.lt.s32.totalorder %v420, 0
    %v422 = vsub.s32 0, %v420
    %v423 = vsel %vm421, %v422, %v420
    %v424 = vclz %v423
    %v425 = vsub.s32 %v424, 2
    %vm426 = vcmp.gt.s32.totalorder 0, %v425
    %v427 = vsel %vm426, 0, %v425
    %v428 = vsub.s32 32, %v427
    %v429 = vshll.u32 %v420, %v427
    %v430 = vshrl.u32 %v412, %v428
    %v431 = vor.u32 %v429, %v430
    %v432 = vsub.s32 4294967266, %v427
    %v433 = vadd.s32 %v432, 127
    %v434 = vshll.u32 %v433, 23
    %v435 = vor.u32 4788187, %v434
    %v436 = vand.u32 2147483647, %v435
    %v438 = vcvt.s32.f32 %v431
    %v439 = vmul.f32 %v438, %v436
    %v440 = vxor.u32 %v439, 2147483648
    %v441 = vsel %vm320, %v440, %v439
    %v442 = vsub.s32 4, %v418
    %v443 = vsel %vm320, %v442, %v418
    %v444 = vsel %vm319, %v159, %v441
    %v445 = vsel %vm319, 0, %v443
    %v446 = vmul.f32 %v444, %v444
    %v447 = vmul.f32 %v446, -0.001358992
    %v448 = vadd.f32 %v447, 0.041655596
    %v449 = vmul.f32 %v446, %v448
    %v450 = vadd.f32 %v449, -0.4999988
    %v451 = vmul.f32 %v446, %v450
    %v452 = vadd.f32 1.0, %v451
    %v453 = vmul.f32 %v444, %v444
    %v454 = vmul.f32 %v453, -0.00019511016
    %v455 = vadd.f32 %v454, 0.008332121
    %v456 = vmul.f32 %v453, %v455
    %v457 = vadd.f32 %v456, -0.16666654
    %v458 = vmul.f32 %v453, %v457
    %v459 = vadd.f32 %v458, 1.0
    %v460 = vmul.f32 %v459, %v444
    %vm461 = vweird.f32 %v159
    %v462 = vand.u32 %v445, 3
    %vm463 = vcmp.lt.s32.totalorder %v462, 2
    %vm464 = vcmp.eq.s32.totalorder %v462, 0
    %v465 = vxor.u32 %v460, 2147483648
    %v466 = vsel %vm464, %v452, %v465
    %vm467 = vcmp.eq.s32.totalorder %v462, 2
    %v468 = vxor.u32 %v452, 2147483648
    %v469 = vsel %vm467, %v468, %v460
    %v470 = vsel %vm463, %v466, %v469
    %v471 = vsel %vm461, nan, %v470
    %v472 = vmul.f32 %v161, %v317
    %v473 = vmul.f32 %v163, %v471
    %474 = vst [vmem:[#allocation8] sm:$0xff] %v472
    %475 = vst [vmem:[#allocation8 + $0x10] sm:$0xff] %v473
    %v476 = vand.u32 2147483647, %v158
    %vm477 = vcmp.le.f32.partialorder %v476, 0.7853982
    %vm478 = vcmp.lt.s32.totalorder %v158, 0
    %v479 = vand.u32 %v158, 2139095040
    %v480 = vshrl.u32 %v479, 23
    %v481 = vsub.s32 %v480, 127
    %v482 = vand.u32 2147483647, %v158
    %v483 = vand.u32 %v482, 8388607
    %v484 = vor.u32 %v483, 8388608
    %v485 = vsub.s32 0, %v484
    %v486 = vadd.s32 %v481, 1
    %vm487 = vcmp.gt.s32.totalorder %v486, 0
    %v488 = vsel %vm487, %v486, 0
    %v489 = vshrl.u32 %v488, 5
    %v490 = vand.u32 %v488, 31
    %v491 = vsub.s32 32, %v490
    %v492 = vshrl.u32 683565275, %v491
    %v493 = vshll.u32 683565275, %v490
    %v494 = vshrl.u32 2475754826, %v491
    %v495 = vor.u32 %v493, %v494
    %v496 = vshll.u32 2475754826, %v490
    %v497 = vshrl.u32 2131351028, %v491
    %v498 = vor.u32 %v496, %v497
    %v499 = vshll.u32 2131351028, %v490
    %v500 = vshrl.u32 2102212464, %v491
    %v501 = vor.u32 %v499, %v500
    %v502 = vshll.u32 2102212464, %v490
    %v503 = vshrl.u32 920167782, %v491
    %v504 = vor.u32 %v502, %v503
    %v505 = vshll.u32 920167782, %v490
    %v506 = vshrl.u32 1326507024, %v491
    %v507 = vor.u32 %v505, %v506
    %vm508 = vcmp.lt.s32.totalorder %v489, 1
    %vm509 = vcmp.lt.s32.totalorder %v489, 2
    %vm510 = vcmp.lt.s32.totalorder %v489, 3
    %vm511 = vcmp.lt.s32.totalorder %v489, 4
    %v512 = vsel %vm508, %v492, %v495
    %v513 = vsel %vm511, %v501, 2102212464
    %v514 = vsel %vm510, %v498, %v513
    %v515 = vsel %vm509, %v512, %v514
    %v516 = vsel %vm508, %v495, %v498
    %v517 = vsel %vm511, %v504, 920167782
    %v518 = vsel %vm510, %v501, %v517
    %v519 = vsel %vm509, %v516, %v518
    %v520 = vsel %vm508, %v498, %v501
    %v521 = vsel %vm511, %v507, 1326507024
    %v522 = vsel %vm510, %v504, %v521
    %v523 = vsel %vm509, %v520, %v522
    %v524 = vshll.u32 %v484, 8
    %v525 = vand.u32 %v524, 65535
    %v526 = vshrl.u32 %v524, 16
    %v527 = vand.u32 %v523, 65535
    %v528 = vshrl.u32 %v523, 16
    %v529 = vmul.u32 %v525, %v527
    %v530 = vmul.u32 %v525, %v528
    %v531 = vmul.u32 %v526, %v527
    %v532 = vmul.u32 %v526, %v528
    %v533 = vshll.u32 %v530, 16
    %v534 = vshrl.u32 %v530, 16
    %v535 = vshll.u32 %v531, 16
    %v536 = vshrl.u32 %v531, 16
    %vm537 = vc.u32 %v529, %v533
    %v538 = vsel %vm537, 1, 0
    %v539 = vadd.s32 %v529, %v533
    %v540 = vadd.s32 %v532, %v538
    %vm541 = vc.u32 %v539, %v535
    %v542 = vsel %vm541, 1, 0
    %v543 = vadd.s32 %v539, %v535
    %v544 = vadd.s32 %v540, %v542
    %v545 = vadd.s32 %v544, %v534
    %v546 = vadd.s32 %v545, %v536
    %v547 = vand.u32 %v524, 65535
    %v548 = vshrl.u32 %v524, 16
    %v549 = vand.u32 %v519, 65535
    %v550 = vshrl.u32 %v519, 16
    %v551 = vmul.u32 %v547, %v549
    %v552 = vmul.u32 %v547, %v550
    %v553 = vmul.u32 %v548, %v549
    %v554 = vmul.u32 %v548, %v550
    %v555 = vshll.u32 %v552, 16
    %v556 = vshrl.u32 %v552, 16
    %v557 = vshll.u32 %v553, 16
    %v558 = vshrl.u32 %v553, 16
    %vm559 = vc.u32 %v551, %v555
    %v560 = vsel %vm559, 1, 0
    %v561 = vadd.s32 %v551, %v555
    %v562 = vadd.s32 %v554, %v560
    %vm563 = vc.u32 %v561, %v557
    %v564 = vsel %vm563, 1, 0
    %v565 = vadd.s32 %v561, %v557
    %v566 = vadd.s32 %v562, %v564
    %v567 = vadd.s32 %v566, %v556
    %v568 = vadd.s32 %v567, %v558
    %v569 = vmul.u32 %v524, %v515
    %v570 = vadd.s32 %v546, %v565
    %vm571 = vc.u32 %v546, %v565
    %v572 = vadd.s32 %v568, 1
    %v573 = vsel %vm571, %v572, %v568
    %v574 = vadd.s32 %v569, %v573
    %v575 = vadd.s32 %v574, 536870912
    %v576 = vshrl.u32 %v575, 30
    %v577 = vshll.u32 %v576, 30
    %v578 = vsub.s32 %v574, %v577
    %vm579 = vcmp.lt.s32.totalorder %v578, 0
    %v580 = vsub.s32 0, %v578
    %v581 = vsel %vm579, %v580, %v578
    %v582 = vclz %v581
    %v583 = vsub.s32 %v582, 2
    %vm584 = vcmp.gt.s32.totalorder 0, %v583
    %v585 = vsel %vm584, 0, %v583
    %v586 = vsub.s32 32, %v585
    %v587 = vshll.u32 %v578, %v585
    %v588 = vshrl.u32 %v570, %v586
    %v589 = vor.u32 %v587, %v588
    %v590 = vsub.s32 4294967266, %v585
    %v591 = vadd.s32 %v590, 127
    %v592 = vshll.u32 %v591, 23
    %v593 = vor.u32 4788187, %v592
    %v594 = vand.u32 2147483647, %v593
    %v596 = vcvt.s32.f32 %v589
    %v597 = vmul.f32 %v596, %v594
    %v598 = vxor.u32 %v597, 2147483648
    %v599 = vsel %vm478, %v598, %v597
    %v600 = vsub.s32 4, %v576
    %v601 = vsel %vm478, %v600, %v576
    %v602 = vsel %vm477, %v158, %v599
    %v603 = vsel %vm477, 0, %v601
    %v604 = vmul.f32 %v602, %v602
    %v605 = vmul.f32 %v604, -0.001358992
    %v606 = vadd.f32 %v605, 0.041655596
    %v607 = vmul.f32 %v604, %v606
    %v608 = vadd.f32 %v607, -0.4999988
    %v609 = vmul.f32 %v604, %v608
    %v610 = vadd.f32 1.0, %v609
    %v611 = vmul.f32 %v602, %v602
    %v612 = vmul.f32 %v611, -0.00019511016
    %v613 = vadd.f32 %v612, 0.008332121
    %v614 = vmul.f32 %v611, %v613
    %v615 = vadd.f32 %v614, -0.16666654
    %v616 = vmul.f32 %v611, %v615
    %v617 = vadd.f32 %v616, 1.0
    %v618 = vmul.f32 %v617, %v602
    %vm619 = vweird.f32 %v158
    %v620 = vadd.s32 %v603, 3
    %v621 = vand.u32 %v620, 3
    %vm622 = vcmp.lt.s32.totalorder %v621, 2
    %vm623 = vcmp.eq.s32.totalorder %v621, 0
    %v624 = vxor.u32 %v618, 2147483648
    %v625 = vsel %vm623, %v610, %v624
    %vm626 = vcmp.eq.s32.totalorder %v621, 2
    %v627 = vxor.u32 %v610, 2147483648
    %v628 = vsel %vm626, %v627, %v618
    %v629 = vsel %vm622, %v625, %v628
    %v630 = vsel %vm619, nan, %v629
    %v631 = vand.u32 2147483647, %v159
    %vm632 = vcmp.le.f32.partialorder %v631, 0.7853982
    %vm633 = vcmp.lt.s32.totalorder %v159, 0
    %v634 = vand.u32 %v159, 2139095040
    %v635 = vshrl.u32 %v634, 23
    %v636 = vsub.s32 %v635, 127
    %v637 = vand.u32 2147483647, %v159
    %v638 = vand.u32 %v637, 8388607
    %v639 = vor.u32 %v638, 8388608
    %v640 = vsub.s32 0, %v639
    %v641 = vadd.s32 %v636, 1
    %vm642 = vcmp.gt.s32.totalorder %v641, 0
    %v643 = vsel %vm642, %v641, 0
    %v644 = vshrl.u32 %v643, 5
    %v645 = vand.u32 %v643, 31
    %v646 = vsub.s32 32, %v645
    %v647 = vshrl.u32 683565275, %v646
    %v648 = vshll.u32 683565275, %v645
    %v649 = vshrl.u32 2475754826, %v646
    %v650 = vor.u32 %v648, %v649
    %v651 = vshll.u32 2475754826, %v645
    %v652 = vshrl.u32 2131351028, %v646
    %v653 = vor.u32 %v651, %v652
    %v654 = vshll.u32 2131351028, %v645
    %v655 = vshrl.u32 2102212464, %v646
    %v656 = vor.u32 %v654, %v655
    %v657 = vshll.u32 2102212464, %v645
    %v658 = vshrl.u32 920167782, %v646
    %v659 = vor.u32 %v657, %v658
    %v660 = vshll.u32 920167782, %v645
    %v661 = vshrl.u32 1326507024, %v646
    %v662 = vor.u32 %v660, %v661
    %vm663 = vcmp.lt.s32.totalorder %v644, 1
    %vm664 = vcmp.lt.s32.totalorder %v644, 2
    %vm665 = vcmp.lt.s32.totalorder %v644, 3
    %vm666 = vcmp.lt.s32.totalorder %v644, 4
    %v667 = vsel %vm663, %v647, %v650
    %v668 = vsel %vm666, %v656, 2102212464
    %v669 = vsel %vm665, %v653, %v668
    %v670 = vsel %vm664, %v667, %v669
    %v671 = vsel %vm663, %v650, %v653
    %v672 = vsel %vm666, %v659, 920167782
    %v673 = vsel %vm665, %v656, %v672
    %v674 = vsel %vm664, %v671, %v673
    %v675 = vsel %vm663, %v653, %v656
    %v676 = vsel %vm666, %v662, 1326507024
    %v677 = vsel %vm665, %v659, %v676
    %v678 = vsel %vm664, %v675, %v677
    %v679 = vshll.u32 %v639, 8
    %v680 = vand.u32 %v679, 65535
    %v681 = vshrl.u32 %v679, 16
    %v682 = vand.u32 %v678, 65535
    %v683 = vshrl.u32 %v678, 16
    %v684 = vmul.u32 %v680, %v682
    %v685 = vmul.u32 %v680, %v683
    %v686 = vmul.u32 %v681, %v682
    %v687 = vmul.u32 %v681, %v683
    %v688 = vshll.u32 %v685, 16
    %v689 = vshrl.u32 %v685, 16
    %v690 = vshll.u32 %v686, 16
    %v691 = vshrl.u32 %v686, 16
    %vm692 = vc.u32 %v684, %v688
    %v693 = vsel %vm692, 1, 0
    %v694 = vadd.s32 %v684, %v688
    %v695 = vadd.s32 %v687, %v693
    %vm696 = vc.u32 %v694, %v690
    %v697 = vsel %vm696, 1, 0
    %v698 = vadd.s32 %v694, %v690
    %v699 = vadd.s32 %v695, %v697
    %v700 = vadd.s32 %v699, %v689
    %v701 = vadd.s32 %v700, %v691
    %v702 = vand.u32 %v679, 65535
    %v703 = vshrl.u32 %v679, 16
    %v704 = vand.u32 %v674, 65535
    %v705 = vshrl.u32 %v674, 16
    %v706 = vmul.u32 %v702, %v704
    %v707 = vmul.u32 %v702, %v705
    %v708 = vmul.u32 %v703, %v704
    %v709 = vmul.u32 %v703, %v705
    %v710 = vshll.u32 %v707, 16
    %v711 = vshrl.u32 %v707, 16
    %v712 = vshll.u32 %v708, 16
    %v713 = vshrl.u32 %v708, 16
    %vm714 = vc.u32 %v706, %v710
    %v715 = vsel %vm714, 1, 0
    %v716 = vadd.s32 %v706, %v710
    %v717 = vadd.s32 %v709, %v715
    %vm718 = vc.u32 %v716, %v712
    %v719 = vsel %vm718, 1, 0
    %v720 = vadd.s32 %v716, %v712
    %v721 = vadd.s32 %v717, %v719
    %v722 = vadd.s32 %v721, %v711
    %v723 = vadd.s32 %v722, %v713
    %v724 = vmul.u32 %v679, %v670
    %v725 = vadd.s32 %v701, %v720
    %vm726 = vc.u32 %v701, %v720
    %v727 = vadd.s32 %v723, 1
    %v728 = vsel %vm726, %v727, %v723
    %v729 = vadd.s32 %v724, %v728
    %v730 = vadd.s32 %v729, 536870912
    %v731 = vshrl.u32 %v730, 30
    %v732 = vshll.u32 %v731, 30
    %v733 = vsub.s32 %v729, %v732
    %vm734 = vcmp.lt.s32.totalorder %v733, 0
    %v735 = vsub.s32 0, %v733
    %v736 = vsel %vm734, %v735, %v733
    %v737 = vclz %v736
    %v738 = vsub.s32 %v737, 2
    %vm739 = vcmp.gt.s32.totalorder 0, %v738
    %v740 = vsel %vm739, 0, %v738
    %v741 = vsub.s32 32, %v740
    %v742 = vshll.u32 %v733, %v740
    %v743 = vshrl.u32 %v725, %v741
    %v744 = vor.u32 %v742, %v743
    %v745 = vsub.s32 4294967266, %v740
    %v746 = vadd.s32 %v745, 127
    %v747 = vshll.u32 %v746, 23
    %v748 = vor.u32 4788187, %v747
    %v749 = vand.u32 2147483647, %v748
    %v751 = vcvt.s32.f32 %v744
    %v752 = vmul.f32 %v751, %v749
    %v753 = vxor.u32 %v752, 2147483648
    %v754 = vsel %vm633, %v753, %v752
    %v755 = vsub.s32 4, %v731
    %v756 = vsel %vm633, %v755, %v731
    %v757 = vsel %vm632, %v159, %v754
    %v758 = vsel %vm632, 0, %v756
    %v759 = vmul.f32 %v757, %v757
    %v760 = vmul.f32 %v759, -0.001358992
    %v761 = vadd.f32 %v760, 0.041655596
    %v762 = vmul.f32 %v759, %v761
    %v763 = vadd.f32 %v762, -0.4999988
    %v764 = vmul.f32 %v759, %v763
    %v765 = vadd.f32 1.0, %v764
    %v766 = vmul.f32 %v757, %v757
    %v767 = vmul.f32 %v766, -0.00019511016
    %v768 = vadd.f32 %v767, 0.008332121
    %v769 = vmul.f32 %v766, %v768
    %v770 = vadd.f32 %v769, -0.16666654
    %v771 = vmul.f32 %v766, %v770
    %v772 = vadd.f32 %v771, 1.0
    %v773 = vmul.f32 %v772, %v757
    %vm774 = vweird.f32 %v159
    %v775 = vadd.s32 %v758, 3
    %v776 = vand.u32 %v775, 3
    %vm777 = vcmp.lt.s32.totalorder %v776, 2
    %vm778 = vcmp.eq.s32.totalorder %v776, 0
    %v779 = vxor.u32 %v773, 2147483648
    %v780 = vsel %vm778, %v765, %v779
    %vm781 = vcmp.eq.s32.totalorder %v776, 2
    %v782 = vxor.u32 %v765, 2147483648
    %v783 = vsel %vm781, %v782, %v773
    %v784 = vsel %vm777, %v780, %v783
    %v785 = vsel %vm774, nan, %v784
    %v786 = vmul.f32 %v161, %v630
    %v787 = vmul.f32 %v163, %v785
    %788 = vst [vmem:[#allocation8 + $0x8] sm:$0xff] %v786
    %789 = vst [vmem:[#allocation8 + $0x18] sm:$0xff] %v787
    // Predicated region
    $region26: #{tpu_custom_call.1} parent=1 // pred_check
      _
    $region27: #{tpu_custom_call.1} parent=1 // pred_check_branch
      %791 = sbr.rel (0) target = $region29
    $region28: #{tpu_custom_call.1} parent=1 // pred_region
      %793 = vsyncadd [#allocation4], 0
      %s794 = sshll.u32 [#allocation8], 4
      %s795 = int_to_ptr.vmem [resolvable:$true] %s794
      %s796 = sshll.u32 %s3, 4
      %s797 = int_to_ptr.hbm [resolvable:$true] %s796
      %802 = dma.vmem_to_hbm [thread:$0]  %s795, 512, %s797, [#allocation4], 256, 256, 16
    $region29: #{tpu_custom_call.1} parent=1 // pred_fallthru
      _
    // Predicated region
    $region30: #{tpu_custom_call.1} parent=1 // pred_check
      _
    $region31: #{tpu_custom_call.1} parent=1 // pred_check_branch
      %804 = sbr.rel (0) target = $region33
    $region32: #{tpu_custom_call.1} parent=1 // pred_region
      %806 = dma.done [#allocation4], 512
    $region33: #{tpu_custom_call.1} parent=1 // pred_fallthru
      _
    %807 = vsyncpa [#allocation3], 1
    %808 = vsyncpa [#allocation6], 1
    %809 = vsyncpa [#allocation4], 1

</llo_original>
